<compile_context>
chip_gen: v7x
topology: tpu7x:2x2x1
jax: 0.10.0
libtpu: 0.0.40
codegen_flags: <defaults>
</compile_context>

<pallas_src>
import math

import jax
import jax.numpy as jnp
from jax.experimental import pallas as pl
from jax.experimental.pallas import tpu as pltpu


def _round_up(a, b):
    return (a + b - 1) // b * b


def _permute_kernel(x_ref, p_ref, y_ref):
    # x_ref: [TM, lane], p_ref: [lane, lane] one-hot (block-diagonal) matrix.
    # One-hot matmul == exact permutation; accumulate in f32 on the MXU.
    y = jnp.dot(x_ref[...], p_ref[...], preferred_element_type=jnp.float32)
    y_ref[...] = y.astype(y_ref.dtype)


@jax.jit
def permute_forward(x, perm):
    """Apply last-dim permutation: y[..., j] = x[..., perm[j]].

    Args:
      x:    floating-point array [..., dim].
      perm: int array [dim] with the permutation indices.

    Returns:
      (y, zeros_like(y)) -- same as the PyTorch module's forward().
    """
    if not jnp.issubdtype(x.dtype, jnp.floating):
        # TODO(synk): integer inputs would need a gather path (no int MXU on v7x).
        raise NotImplementedError("permute_forward supports floating dtypes only")

    orig_shape = x.shape
    dim = orig_shape[-1]
    rows = math.prod(orig_shape[:-1]) if len(orig_shape) > 1 else 1
    itemsize = jnp.dtype(x.dtype).itemsize

    # --- choose a lane-dense layout for the feature axis --------------------
    if dim % 128 == 0:
        k, col_pad = 1, 0                              # already lane-dense
    elif 128 % dim == 0:
        k, col_pad = 128 // dim, 0                     # pack k rows -> 128 lanes
    else:
        k, col_pad = 1, _round_up(dim, 128) - dim      # zero-pad features
    dim_p = dim + col_pad
    lane = k * dim_p                                   # kernel's last dim (%128==0)

    # --- permutation matrix (single block, VMEM-resident across the grid) ---
    # p_small[perm[j], j] = 1  =>  (x @ p_small)[j] = x[perm[j]]
    p_small = jax.nn.one_hot(perm, dim, dtype=x.dtype).T
    if col_pad:
        p_small = jnp.pad(p_small, ((0, col_pad), (0, col_pad)))
    if k > 1:
        p_block = jnp.kron(jnp.eye(k, dtype=x.dtype), p_small)
    else:
        p_block = p_small                              # [lane, lane]

    # --- row tiling: big tiles amortize per-step pipeline overhead ----------
    sub = 8 * max(1, 4 // itemsize)                    # sublane multiple per dtype
    rows_packed = pl.cdiv(rows, k)
    tile_budget = 2 << 20                              # ~2 MiB of input per step
    tm_cap = max(sub, (tile_budget // (lane * itemsize)) // sub * sub)
    TM = min(tm_cap, _round_up(rows_packed, sub))
    rows_final = _round_up(rows_packed, TM)

    # --- pad + pack input to [rows_final, lane] ------------------------------
    x2d = x.reshape(rows, dim)
    if col_pad:
        x2d = jnp.pad(x2d, ((0, 0), (0, col_pad)))
    pad_rows = rows_final * k - rows
    if pad_rows:
        x2d = jnp.pad(x2d, ((0, pad_rows), (0, 0)))
    x_packed = x2d.reshape(rows_final, lane)

    bytes_x = rows_final * lane * itemsize
    cost = pl.CostEstimate(
        flops=2 * rows_final * lane * lane,
        transcendentals=0,
        bytes_accessed=2 * bytes_x + lane * lane * itemsize,
    )

    # VMEM: x & y tiles double-buffered + permutation matrix + f32 matmul temp.
    # TODO(synk): for very large dim (lane*lane matrix > ~8 MiB) a K-blocked
    # variant would be needed; typical flow dims are small so this is fine.
    tile_bytes = TM * lane * itemsize
    vmem_needed = 4 * tile_bytes + 2 * lane * lane * itemsize + TM * lane * 4
    vmem_limit = int(min(max(vmem_needed + (2 << 20), 16 << 20), 48 << 20))

    y_packed = pl.pallas_call(
        _permute_kernel,
        out_shape=jax.ShapeDtypeStruct((rows_final, lane), x.dtype),
        grid=(rows_final // TM,),
        in_specs=[
            pl.BlockSpec((TM, lane), lambda i: (i, 0)),
            pl.BlockSpec((lane, lane), lambda i: (0, 0)),  # P stays VMEM-resident
        ],
        out_specs=pl.BlockSpec((TM, lane), lambda i: (i, 0)),
        compiler_params=pltpu.CompilerParams(
            dimension_semantics=("parallel",),
            vmem_limit_bytes=vmem_limit,
        ),
        cost_estimate=cost,
    )(x_packed, p_block)

    # --- unpack / unpad ------------------------------------------------------
    y2d = y_packed.reshape(rows_final * k, dim_p)[:rows, :dim]
    y = y2d.reshape(orig_shape)
    # Log-det term is identically zero; produce it outside the kernel.
    return y, jnp.zeros_like(y)


def make_permutation(dim, seed=42):
    """Deterministic permutation (stand-in for torch.randperm in __init__)."""
    perm = jax.random.permutation(jax.random.PRNGKey(seed), dim)
    inverse_perm = jnp.argsort(perm)
    return perm, inverse_perm


if __name__ == "__main__":
    batch, seq, dim = 2, 8, 32  # small shapes; dim is the permuted axis
    key = jax.random.PRNGKey(0)
    x = jax.random.normal(key, (batch, seq, dim), dtype=jnp.float32)

    perm, inverse_perm = make_permutation(dim, seed=42)

    y, z = permute_forward(x, perm)
    jax.block_until_ready((y, z))

    # Reference check against the gather semantics of the PyTorch module.
    y_ref = x[..., perm]
    assert y.shape == x.shape and z.shape == x.shape
    assert jnp.array_equal(y, y_ref), "permutation mismatch"
    assert jnp.all(z == 0), "second output must be zeros"

    # Round-trip through the inverse permutation (checks make_permutation too).
    x_back, _ = permute_forward(y, inverse_perm)
    assert jnp.array_equal(x_back, x), "inverse permutation mismatch"

    # Also exercise a non-divisor feature width (column-padding path).
    x2 = jax.random.normal(jax.random.PRNGKey(1), (4, 6, 33), dtype=jnp.float32)
    p2, _ = make_permutation(33, seed=7)
    y2, z2 = permute_forward(x2, p2)
    jax.block_until_ready((y2, z2))
    assert jnp.array_equal(y2, x2[..., p2]), "padded-dim permutation mismatch"
    assert jnp.all(z2 == 0)

    print("KERNEL_OK")
</pallas_src>

<mosaic_0001>
module attributes {stable_mosaic.version = 11 : i64} {
  func.func @_permute_kernel(%arg0: i32, %arg1: memref<8x128xf32, #tpu.memory_space<vmem>>, %arg2: memref<128x128xf32, #tpu.memory_space<vmem>>, %arg3: memref<8x128xf32, #tpu.memory_space<vmem>>) attributes {dimension_semantics = [#tpu.dimension_semantics<parallel>], iteration_bounds = array<i64: 1>, scalar_prefetch = 0 : i64, scratch_operands = 0 : i64, tpu.core_type = #tpu.core_type<tc>, window_params = [{transform_indices = @transform_0, window_bounds = array<i64: 8, 128>}, {pipeline_mode = #tpu.pipeline_mode<synchronous>, transform_indices = @transform_1, window_bounds = array<i64: 128, 128>}, {transform_indices = @transform_2, window_bounds = array<i64: 8, 128>}]} {
    %c0 = arith.constant 0 : index
    %c0_0 = arith.constant 0 : index
    %0 = vector.load %arg1[%c0, %c0_0] : memref<8x128xf32, #tpu.memory_space<vmem>>, vector<8x128xf32>
    %c0_1 = arith.constant 0 : index
    %c0_2 = arith.constant 0 : index
    %1 = vector.load %arg2[%c0_1, %c0_2] : memref<128x128xf32, #tpu.memory_space<vmem>>, vector<128x128xf32>
    %cst = arith.constant dense<0.000000e+00> : vector<8x128xf32>
    %2 = tpu.matmul %0, %1, %cst {dimension_numbers = #tpu.dot_dimension_numbers<[1], [0], [0], [1], [0, 0, 1, 1], [], []>} : vector<8x128xf32>, vector<128x128xf32>, vector<8x128xf32> -> vector<8x128xf32>
    %c0_3 = arith.constant 0 : index
    %c0_4 = arith.constant 0 : index
    %3 = vector.load %arg3[%c0_3, %c0_4] : memref<8x128xf32, #tpu.memory_space<vmem>>, vector<8x128xf32>
    tpu.vector_store %arg3[%c0_3, %c0_4], %2 {strides = array<i32>} : memref<8x128xf32, #tpu.memory_space<vmem>>, vector<8x128xf32>,
    return
  }
  func.func @transform_0(%arg0: i32) -> (i32, i32) {
    %c0_i32 = arith.constant 0 : i32
    %c0_i32_0 = arith.constant 0 : i32
    return %arg0, %c0_i32 : i32, i32
  }
  func.func @transform_1(%arg0: i32) -> (i32, i32) {
    %c0_i32 = arith.constant 0 : i32
    %c0_i32_0 = arith.constant 0 : i32
    %c0_i32_1 = arith.constant 0 : i32
    return %c0_i32, %c0_i32_0 : i32, i32
  }
  func.func @transform_2(%arg0: i32) -> (i32, i32) {
    %c0_i32 = arith.constant 0 : i32
    %c0_i32_0 = arith.constant 0 : i32
    return %arg0, %c0_i32 : i32, i32
  }
}

</mosaic_0001>

<llo_original>
// kernel: permute_forward.1
$region0: #{permute_forward.1}
  #allocation0 [shape = 'u32[]', space=smem, size = 0x4, offset = 0x4, fixed_abs, tag = 'smem constant byte address 0x4 - core index']
  #allocation1 [shape = 'u32[144,128]{1,0:T(1,128)}', space=vmem, size = 0x12000, scoped, tag = 'internal scratch']
  %s0 = inlined_call_operand.vmem [shape: f32[8,128], index: 0, kind: input, shape index: {}]
  %s1 = inlined_call_operand.vmem [shape: f32[128,128], index: 1, kind: input, shape index: {}]
  %s2 = inlined_call_operand.vmem [shape: f32[8,128], index: 2, kind: output, shape index: {}]
  %s3 = sld [smem:[#allocation0]]
  $region18: #{permute_forward.1} parent=0
    _
  %s5 = ssub.s32 1, %s3
  %s6 = scalar_select 0, %s5, %s3
  // Predicated region
  $region2: #{permute_forward.1} parent=0 // pred_check
    _
  $region3: #{permute_forward.1} parent=0 // pred_check_branch
    %8 = sbr.rel (0) target = $region5
  $region4: #{permute_forward.1} parent=0 // pred_region
    _
  $region5: #{permute_forward.1} parent=0 // pred_fallthru
    _
  // Predicated region
  $region6: #{permute_forward.1} parent=0 // pred_check
    _
  $region7: #{permute_forward.1} parent=0 // pred_check_branch
    %10 = sbr.rel (0) target = $region9
  $region8: #{permute_forward.1} parent=0 // pred_region
    _
  $region9: #{permute_forward.1} parent=0 // pred_fallthru
    _
  %v11 = vld [vmem:[%s0] sm:$0xff]
  %v12 = vld [vmem:[%s1] sm:$0xff]
  %v13 = vld [vmem:[%s1 + $0x8] sm:$0xff]
  %v14 = vld [vmem:[%s1 + $0x10] sm:$0xff]
  %v15 = vld [vmem:[%s1 + $0x18] sm:$0xff]
  %v16 = vld [vmem:[%s1 + $0x20] sm:$0xff]
  %v17 = vld [vmem:[%s1 + $0x28] sm:$0xff]
  %v18 = vld [vmem:[%s1 + $0x30] sm:$0xff]
  %v19 = vld [vmem:[%s1 + $0x38] sm:$0xff]
  %v20 = vld [vmem:[%s1 + $0x40] sm:$0xff]
  %v21 = vld [vmem:[%s1 + $0x48] sm:$0xff]
  %v22 = vld [vmem:[%s1 + $0x50] sm:$0xff]
  %v23 = vld [vmem:[%s1 + $0x58] sm:$0xff]
  %v24 = vld [vmem:[%s1 + $0x60] sm:$0xff]
  %v25 = vld [vmem:[%s1 + $0x68] sm:$0xff]
  %v26 = vld [vmem:[%s1 + $0x70] sm:$0xff]
  %v27 = vld [vmem:[%s1 + $0x78] sm:$0xff]
  %28 = vmatprep.subr.mxu0 0.0
  %29 = vmatpush1.msra.mxu0 %v12
  %30 = vmatprep.subr.mxu0 0.0
  %31 = vmatpush1.msra.mxu0 %v13
  %32 = vmatprep.subr.mxu0 0.0
  %33 = vmatpush1.msra.mxu0 %v14
  %34 = vmatprep.subr.mxu0 0.0
  %35 = vmatpush1.msra.mxu0 %v15
  %36 = vmatprep.subr.mxu0 0.0
  %37 = vmatpush1.msra.mxu0 %v16
  %38 = vmatprep.subr.mxu0 0.0
  %39 = vmatpush1.msra.mxu0 %v17
  %40 = vmatprep.subr.mxu0 0.0
  %41 = vmatpush1.msra.mxu0 %v18
  %42 = vmatprep.subr.mxu0 0.0
  %43 = vmatpush1.msra.mxu0 %v19
  %44 = vmatprep.subr.mxu0 0.0
  %45 = vmatpush1.msra.mxu0 %v20
  %46 = vmatprep.subr.mxu0 0.0
  %47 = vmatpush1.msra.mxu0 %v21
  %48 = vmatprep.subr.mxu0 0.0
  %49 = vmatpush1.msra.mxu0 %v22
  %50 = vmatprep.subr.mxu0 0.0
  %51 = vmatpush1.msra.mxu0 %v23
  %52 = vmatprep.subr.mxu0 0.0
  %53 = vmatpush1.msra.mxu0 %v24
  %54 = vmatprep.subr.mxu0 0.0
  %55 = vmatpush1.msra.mxu0 %v25
  %56 = vmatprep.subr.mxu0 0.0
  %57 = vmatpush1.msra.mxu0 %v26
  %58 = vmatprep.subr.mxu0 0.0
  %59 = vmatpush1.msra.mxu0 %v27
  %60 = vmatprep.subr.mxu0 0.0
  %61 = vmatpush1.msra.mxu0 0.0
  %62 = vmatprep.subr.mxu0 0.0
  %63 = vmatpush1.msra.mxu0 0.0
  %64 = vmatprep.subr.mxu0 0.0
  %65 = vmatpush1.msra.mxu0 0.0
  %66 = vmatprep.subr.mxu0 0.0
  %67 = vmatpush1.msra.mxu0 0.0
  %68 = vmatprep.subr.mxu0 0.0
  %69 = vmatpush1.msra.mxu0 0.0
  %70 = vmatprep.subr.mxu0 0.0
  %71 = vmatpush1.msra.mxu0 0.0
  %72 = vmatprep.subr.mxu0 0.0
  %73 = vmatpush1.msra.mxu0 0.0
  %74 = vmatprep.subr.mxu0 0.0
  %75 = vmatpush1.msra.mxu0 0.0
  %76 = vmatprep.subr.mxu0 0.0
  %77 = vmatpush1.msra.mxu0 0.0
  %78 = vmatprep.subr.mxu0 0.0
  %79 = vmatpush1.msra.mxu0 0.0
  %80 = vmatprep.subr.mxu0 0.0
  %81 = vmatpush1.msra.mxu0 0.0
  %82 = vmatprep.subr.mxu0 0.0
  %83 = vmatpush1.msra.mxu0 0.0
  %84 = vmatprep.subr.mxu0 0.0
  %85 = vmatpush1.msra.mxu0 0.0
  %86 = vmatprep.subr.mxu0 0.0
  %87 = vmatpush1.msra.mxu0 0.0
  %88 = vmatprep.subr.mxu0 0.0
  %89 = vmatpush1.msra.mxu0 0.0
  %90 = vmatprep.subr.mxu0 0.0
  %91 = vmatpush1.msra.mxu0 0.0
  %92 = vmatprep.mubr.f32.mxu0 0.0
  %93 = vmatmul.mubr.f32.gmra.mrb[0].mxu0 %v11
  %v94 = vpop.f32.mrb[0].mxu0
  %v95 = vadd.f32 0.0, %v94
  %v96 = vpop.f32.mrb[0].mxu0
  %97 = vdwg.mxu0
  %98 = vst [vmem:[%s2] sm:$0xff] %v95
  // Predicated region
  $region10: #{permute_forward.1} parent=0 // pred_check
    _
  $region11: #{permute_forward.1} parent=0 // pred_check_branch
    %100 = sbr.rel (0) target = $region13
  $region12: #{permute_forward.1} parent=0 // pred_region
    _
  $region13: #{permute_forward.1} parent=0 // pred_fallthru
    _
  // Predicated region
  $region14: #{permute_forward.1} parent=0 // pred_check
    _
  $region15: #{permute_forward.1} parent=0 // pred_check_branch
    %102 = sbr.rel (0) target = $region17
  $region16: #{permute_forward.1} parent=0 // pred_region
    _
  $region17: #{permute_forward.1} parent=0 // pred_fallthru
    _

</llo_original>
